<compile_context>
chip_gen: v7x
topology: tpu7x:2x2x1
jax: 0.10.0
libtpu: 0.0.40
codegen_flags: <defaults>
</compile_context>

<pallas_src>
import jax
import jax.numpy as jnp
from jax.experimental import pallas as pl
from jax.experimental.pallas import tpu as pltpu


def _specaug_kernel(params_ref, x_ref, o_ref):
    # params_ref (SMEM, int32[8]):
    #   [f_start0, f_end0, f_start1, f_end1, t_start0, t_end0, t_start1, t_end1]
    x = x_ref[...]                                   # (nb, F, Tt)
    _, Fb, Tb = x.shape
    t_off = pl.program_id(1) * Tb                    # element offset of this T tile

    # Small per-axis iotas; no (nb, F, Tt)-sized int32 temporaries.
    fidx = jax.lax.broadcasted_iota(jnp.int32, (Fb, 1), 0)
    tidx = jax.lax.broadcasted_iota(jnp.int32, (1, Tb), 1) + t_off

    f0a, f1a = params_ref[0], params_ref[1]
    f0b, f1b = params_ref[2], params_ref[3]
    t0a, t1a = params_ref[4], params_ref[5]
    t0b, t1b = params_ref[6], params_ref[7]

    fmask = ((fidx >= f0a) & (fidx < f1a)) | ((fidx >= f0b) & (fidx < f1b))  # (Fb, 1)
    tmask = ((tidx >= t0a) & (tidx < t1a)) | ((tidx >= t0b) & (tidx < t1b))  # (1, Tb)
    keep = jnp.logical_not(fmask | tmask)                                    # (Fb, Tb)

    o_ref[...] = jnp.where(keep[None, :, :], x, jnp.zeros((), x.dtype))


# 2 arrays x 2 pipeline buffers x 4 MiB = 16 MiB of block buffers, inside the
# 32 MiB scoped-VMEM limit we request (safe on v5e/v6e/v7x).
_TARGET_BLOCK_BYTES = 4 * 1024 * 1024


def _apply_masks_pallas(x_flat, params, target_block_bytes=_TARGET_BLOCK_BYTES):
    """x_flat: (B*C, F, T); params: int32[8] band boundaries shared across batch."""
    BC, F, T = x_flat.shape
    dtype = x_flat.dtype
    itemsize = jnp.dtype(dtype).itemsize

    # Time (lane) tile: full T if one item's (F, T) slab fits the block-byte
    # target, else the largest 128-multiple that does (>=128).  No padding: a
    # partial last T tile just costs masked tail stores.
    if F * T * itemsize <= target_block_bytes:
        Tt = T
    else:
        Tt = max(128, (target_block_bytes // (F * itemsize)) // 128 * 128)
        Tt = min(Tt, ((T + 127) // 128) * 128)
    num_t_blocks = pl.cdiv(T, Tt)

    # Fuse batch*channel items per block: largest divisor of BC under the target,
    # so the BC axis stays pad-free and the grid divides exactly.
    block_item_bytes = F * Tt * itemsize
    max_nb = max(1, int(target_block_bytes // block_item_bytes))
    nb = 1
    for d in range(min(BC, max_nb), 0, -1):
        if BC % d == 0:
            nb = d
            break

    return pl.pallas_call(
        _specaug_kernel,
        out_shape=jax.ShapeDtypeStruct((BC, F, T), dtype),
        grid_spec=pltpu.PrefetchScalarGridSpec(
            num_scalar_prefetch=1,
            grid=(BC // nb, num_t_blocks),
            in_specs=[
                pl.BlockSpec((nb, F, Tt), lambda i, j, params: (i, 0, j)),
            ],
            out_specs=pl.BlockSpec((nb, F, Tt), lambda i, j, params: (i, 0, j)),
        ),
        compiler_params=pltpu.CompilerParams(
            dimension_semantics=("parallel", "parallel"),
            vmem_limit_bytes=32 * 1024 * 1024,
        ),
    )(params, x_flat)


def _sample_mask(key, dim_size, mask_param):
    """Mirror torchaudio.functional.mask_along_axis sampling (mask_value=0 path)."""
    k1, k2 = jax.random.split(key)
    value = jax.random.uniform(k1) * mask_param
    value = jnp.minimum(value, dim_size)               # guard mask_param > dim_size
    min_value = jax.random.uniform(k2) * (dim_size - value)
    start = min_value.astype(jnp.int32)
    end = (min_value + value).astype(jnp.int32)
    return start, end


def _sample_params(key, F, T, freq_mask, time_mask):
    kf0, kt0, kf1, kt1 = jax.random.split(key, 4)
    # Sampling order matches the nn.Sequential: Freq, Time, Freq, Time.
    f0a, f1a = _sample_mask(kf0, F, freq_mask)
    t0a, t1a = _sample_mask(kt0, T, time_mask)
    f0b, f1b = _sample_mask(kf1, F, freq_mask)
    t0b, t1b = _sample_mask(kt1, T, time_mask)
    return jnp.stack([f0a, f1a, f0b, f1b, t0a, t1a, t0b, t1b]).astype(jnp.int32)


class SpecAugment:
    def __init__(self, sample_rate, freq_mask=15, time_mask=35):
        self.sample_rate = sample_rate
        self.freq_mask = freq_mask
        self.time_mask = time_mask

    def __call__(self, x, key):
        # x: (B, C, F, T)  (PyTorch NCHW-style spectrogram batch)
        B, C, F, T = x.shape
        params = _sample_params(key, F, T, self.freq_mask, self.time_mask)
        out_flat = _apply_masks_pallas(x.reshape(B * C, F, T), params)
        return out_flat.reshape(B, C, F, T)


def _reference_flat(x_flat, params):
    """Pure-JAX reference of the union-of-bands zero masking on (N, F, T)."""
    _, F, T = x_flat.shape
    fidx = jnp.arange(F)[:, None]
    tidx = jnp.arange(T)[None, :]
    f0a, f1a, f0b, f1b, t0a, t1a, t0b, t1b = [params[i] for i in range(8)]
    mask = (
        ((fidx >= f0a) & (fidx < f1a))
        | ((fidx >= f0b) & (fidx < f1b))
        | ((tidx >= t0a) & (tidx < t1a))
        | ((tidx >= t0b) & (tidx < t1b))
    )
    return jnp.where(mask[None], jnp.zeros((), x_flat.dtype), x_flat)


if __name__ == "__main__":
    key = jax.random.PRNGKey(0)
    kx1, km1, kx2, km2, kx3, km3 = jax.random.split(key, 6)

    aug = SpecAugment(sample_rate=16000, freq_mask=15, time_mask=35)

    # Case 1: lane/sublane aligned shapes; BC items fused into a single block.
    B, C, F, T = 2, 4, 16, 128
    x = jax.random.normal(kx1, (B, C, F, T), dtype=jnp.float32)
    out = jax.block_until_ready(aug(x, km1))
    ref = _reference_flat(x.reshape(B * C, F, T), _sample_params(km1, F, T, 15, 35))
    assert out.shape == x.shape and out.dtype == x.dtype
    assert jnp.allclose(out.reshape(B * C, F, T), ref), "mismatch (aligned case)"

    # Case 2: ragged F/T exercising full-dim trailing blocks (no padding path).
    B2, C2, F2, T2 = 2, 2, 13, 100
    x2 = jax.random.normal(kx2, (B2, C2, F2, T2), dtype=jnp.float32)
    out2 = jax.block_until_ready(aug(x2, km2))
    ref2 = _reference_flat(x2.reshape(B2 * C2, F2, T2),
                           _sample_params(km2, F2, T2, 15, 35))
    assert out2.shape == x2.shape and out2.dtype == x2.dtype
    assert jnp.allclose(out2.reshape(B2 * C2, F2, T2), ref2), "mismatch (ragged case)"

    # Case 3: force the T-tiled grid path (tiny block target) with a partial
    # last time tile, checking the program_id(1) time-offset logic.
    B3, C3, F3, T3 = 1, 2, 16, 300
    x3 = jax.random.normal(kx3, (B3, C3, F3, T3), dtype=jnp.float32)
    params3 = _sample_params(km3, F3, T3, 15, 35)
    out3 = jax.block_until_ready(
        _apply_masks_pallas(x3.reshape(B3 * C3, F3, T3), params3,
                            target_block_bytes=F3 * 128 * 4)
    )
    ref3 = _reference_flat(x3.reshape(B3 * C3, F3, T3), params3)
    assert out3.shape == (B3 * C3, F3, T3) and out3.dtype == x3.dtype
    assert jnp.allclose(out3, ref3), "mismatch (T-tiled case)"

    print("KERNEL_OK")
</pallas_src>

<mosaic_0001>
module attributes {stable_mosaic.version = 11 : i64} {
  func.func @_specaug_kernel(%arg0: i32, %arg1: i32, %arg2: memref<8xi32, #tpu.memory_space<smem>>, %arg3: memref<8x16x128xf32, #tpu.memory_space<vmem>>, %arg4: memref<8x16x128xf32, #tpu.memory_space<vmem>>) attributes {dimension_semantics = [#tpu.dimension_semantics<parallel>, #tpu.dimension_semantics<parallel>], iteration_bounds = array<i64: 1, 1>, scalar_prefetch = 1 : i64, scratch_operands = 0 : i64, tpu.core_type = #tpu.core_type<tc>, window_params = [{transform_indices = @transform_0, window_bounds = array<i64: 8, 16, 128>}, {transform_indices = @transform_1, window_bounds = array<i64: 8, 16, 128>}]} {
    %c0 = arith.constant 0 : index
    %c0_0 = arith.constant 0 : index
    %c0_1 = arith.constant 0 : index
    %0 = vector.load %arg3[%c0, %c0_0, %c0_1] : memref<8x16x128xf32, #tpu.memory_space<vmem>>, vector<8x16x128xf32>
    %c128_i32 = arith.constant 128 : i32
    %1 = arith.muli %arg1, %c128_i32 : i32
    %2 = tpu.iota {dimensions = array<i32: 0>} : vector<16x1xi32>
    %3 = tpu.iota {dimensions = array<i32: 1>} : vector<1x128xi32>
    %4 = vector.broadcast %1 : i32 to vector<1x128xi32>
    %5 = arith.addi %3, %4 : vector<1x128xi32>
    %c0_2 = arith.constant 0 : index
    %6 = memref.load %arg2[%c0_2] : memref<8xi32, #tpu.memory_space<smem>>
    %c1 = arith.constant 1 : index
    %7 = memref.load %arg2[%c1] : memref<8xi32, #tpu.memory_space<smem>>
    %c2 = arith.constant 2 : index
    %8 = memref.load %arg2[%c2] : memref<8xi32, #tpu.memory_space<smem>>
    %c3 = arith.constant 3 : index
    %9 = memref.load %arg2[%c3] : memref<8xi32, #tpu.memory_space<smem>>
    %c4 = arith.constant 4 : index
    %10 = memref.load %arg2[%c4] : memref<8xi32, #tpu.memory_space<smem>>
    %c5 = arith.constant 5 : index
    %11 = memref.load %arg2[%c5] : memref<8xi32, #tpu.memory_space<smem>>
    %c6 = arith.constant 6 : index
    %12 = memref.load %arg2[%c6] : memref<8xi32, #tpu.memory_space<smem>>
    %c7 = arith.constant 7 : index
    %13 = memref.load %arg2[%c7] : memref<8xi32, #tpu.memory_space<smem>>
    %14 = vector.broadcast %6 : i32 to vector<16x1xi32>
    %15 = arith.cmpi sge, %2, %14 : vector<16x1xi32>
    %16 = vector.broadcast %7 : i32 to vector<16x1xi32>
    %17 = arith.cmpi slt, %2, %16 : vector<16x1xi32>
    %18 = arith.andi %15, %17 : vector<16x1xi1>
    %19 = vector.broadcast %8 : i32 to vector<16x1xi32>
    %20 = arith.cmpi sge, %2, %19 : vector<16x1xi32>
    %21 = vector.broadcast %9 : i32 to vector<16x1xi32>
    %22 = arith.cmpi slt, %2, %21 : vector<16x1xi32>
    %23 = arith.andi %20, %22 : vector<16x1xi1>
    %24 = arith.ori %18, %23 : vector<16x1xi1>
    %25 = vector.broadcast %10 : i32 to vector<1x128xi32>
    %26 = arith.cmpi sge, %5, %25 : vector<1x128xi32>
    %27 = vector.broadcast %11 : i32 to vector<1x128xi32>
    %28 = arith.cmpi slt, %5, %27 : vector<1x128xi32>
    %29 = arith.andi %26, %28 : vector<1x128xi1>
    %30 = vector.broadcast %12 : i32 to vector<1x128xi32>
    %31 = arith.cmpi sge, %5, %30 : vector<1x128xi32>
    %32 = vector.broadcast %13 : i32 to vector<1x128xi32>
    %33 = arith.cmpi slt, %5, %32 : vector<1x128xi32>
    %34 = arith.andi %31, %33 : vector<1x128xi1>
    %35 = arith.ori %29, %34 : vector<1x128xi1>
    %36 = vector.broadcast %24 : vector<16x1xi1> to vector<16x128xi1>
    %37 = vector.broadcast %35 : vector<1x128xi1> to vector<16x128xi1>
    %38 = arith.ori %36, %37 : vector<16x128xi1>
    %cst = arith.constant dense<true> : vector<16x128xi1>
    %39 = arith.xori %38, %cst : vector<16x128xi1>
    %40 = vector.shape_cast %39 : vector<16x128xi1> to vector<1x16x128xi1>
    %cst_3 = arith.constant 0.000000e+00 : f32
    %41 = vector.shape_cast %40 : vector<1x16x128xi1> to vector<1x16x128xi1>
    %42 = vector.broadcast %41 : vector<1x16x128xi1> to vector<8x16x128xi1>
    %43 = vector.broadcast %cst_3 : f32 to vector<8x16x128xf32>
    %44 = arith.select %42, %0, %43 : vector<8x16x128xi1>, vector<8x16x128xf32>
    %c0_4 = arith.constant 0 : index
    %c0_5 = arith.constant 0 : index
    %c0_6 = arith.constant 0 : index
    %45 = vector.load %arg4[%c0_4, %c0_5, %c0_6] : memref<8x16x128xf32, #tpu.memory_space<vmem>>, vector<8x16x128xf32>
    tpu.vector_store %arg4[%c0_4, %c0_5, %c0_6], %44 {strides = array<i32>} : memref<8x16x128xf32, #tpu.memory_space<vmem>>, vector<8x16x128xf32>,
    return
  }
  func.func @transform_0(%arg0: i32, %arg1: i32, %arg2: memref<8xi32, #tpu.memory_space<smem>>) -> (i32, i32, i32) {
    %c0_i32 = arith.constant 0 : i32
    %c0_i32_0 = arith.constant 0 : i32
    return %arg0, %c0_i32, %arg1 : i32, i32, i32
  }
  func.func @transform_1(%arg0: i32, %arg1: i32, %arg2: memref<8xi32, #tpu.memory_space<smem>>) -> (i32, i32, i32) {
    %c0_i32 = arith.constant 0 : i32
    %c0_i32_0 = arith.constant 0 : i32
    return %arg0, %c0_i32, %arg1 : i32, i32, i32
  }
}

</mosaic_0001>

<llo_original>
// kernel: tpu_custom_call.1
$region0: #{tpu_custom_call.1}
  #allocation0 [shape = 'u32[]', space=smem, size = 0x4, offset = 0x4, fixed_abs, tag = 'smem constant byte address 0x4 - core index']
  #allocation1 [shape = 'u32[144,128]{1,0:T(1,128)}', space=vmem, size = 0x12000, scoped, tag = 'internal scratch']
  #allocation2 [shape = 's32[1]{0}', space=sflag, size = 0x4, scoped, tag = 'scoped memory for tpu_custom_call.1']
  #allocation3 [shape = 'u8[512]{0}', space=smem, size = 0x200, scoped, tag = 'prefetched SMEM operand 0']
  %s0 = inlined_call_operand.hbm [shape: s32[8], index: 0, kind: input, shape index: {}]
  %s1 = inlined_call_operand.hbm [shape: f32[8,16,128], index: 1, kind: input, shape index: {}]
  %s2 = inlined_call_operand.hbm [shape: f32[8,16,128], index: 2, kind: output, shape index: {}]
  %s3 = sld [smem:[#allocation0]]
  $region18: #{tpu_custom_call.1} parent=0
    _
  %s5 = ssub.s32 1, %s3
  %s6 = scalar_select 0, %s5, %s3
  %8 = dma.hbm_to_smem %s0, 16, [#allocation3], [#allocation2]
  %9 = dma.done [#allocation2], 16
  %10 = sfence
  $region1: #{tpu_custom_call.1} parent=0
    #allocation4 [shape = 'u8[65536]{0}', space=vmem, size = 0x10000, scoped, tag = 'input window, operand 1, single buffered']
    #allocation5 [shape = 's32[1]{0}', space=sflag, size = 0x4, scoped, tag = 'scoped memory for tpu_custom_call.1']
    #allocation6 [shape = 's32[1]{0}', space=sflag, size = 0x4, scoped, tag = 'scoped memory for tpu_custom_call.1']
    #allocation7 [shape = 'u8[65536]{0}', space=vmem, size = 0x10000, scoped, tag = 'output window, operand 0, single buffered']
    %11 = vsyncpa [#allocation5], 0
    %12 = vsyncpa [#allocation6], 0
    // Predicated region
    $region2: #{tpu_custom_call.1} parent=1 // pred_check
      _
    $region3: #{tpu_custom_call.1} parent=1 // pred_check_branch
      %14 = sbr.rel (0) target = $region5
    $region4: #{tpu_custom_call.1} parent=1 // pred_region
      %s16 = ssub.s32 2048, 2048
      %17 = vsyncadd [#allocation5], %s16
      %s18 = sshll.u32 [#allocation4], 4
      %s19 = int_to_ptr.vmem [resolvable:$true] %s18
      %24 = dma.hbm_to_vmem [thread:$0]  %s1, 2048, %s19, [#allocation5], 128, 128, 8
    $region5: #{tpu_custom_call.1} parent=1 // pred_fallthru
      _
    // Predicated region
    $region6: #{tpu_custom_call.1} parent=1 // pred_check
      _
    $region7: #{tpu_custom_call.1} parent=1 // pred_check_branch
      %26 = sbr.rel (0) target = $region9
    $region8: #{tpu_custom_call.1} parent=1 // pred_region
      %27 = dma.done [#allocation5], 2048
    $region9: #{tpu_custom_call.1} parent=1 // pred_fallthru
      _
    %v28 = vld [vmem:[#allocation4] sm:$0xff]
    %v29 = vld [vmem:[#allocation4 + $0x8] sm:$0xff]
    %v30 = vld [vmem:[#allocation4 + $0x10] sm:$0xff]
    %v31 = vld [vmem:[#allocation4 + $0x18] sm:$0xff]
    %v32 = vld [vmem:[#allocation4 + $0x20] sm:$0xff]
    %v33 = vld [vmem:[#allocation4 + $0x28] sm:$0xff]
    %v34 = vld [vmem:[#allocation4 + $0x30] sm:$0xff]
    %v35 = vld [vmem:[#allocation4 + $0x38] sm:$0xff]
    %v36 = vld [vmem:[#allocation4 + $0x40] sm:$0xff]
    %v37 = vld [vmem:[#allocation4 + $0x48] sm:$0xff]
    %v38 = vld [vmem:[#allocation4 + $0x50] sm:$0xff]
    %v39 = vld [vmem:[#allocation4 + $0x58] sm:$0xff]
    %v40 = vld [vmem:[#allocation4 + $0x60] sm:$0xff]
    %v41 = vld [vmem:[#allocation4 + $0x68] sm:$0xff]
    %v42 = vld [vmem:[#allocation4 + $0x70] sm:$0xff]
    %v43 = vld [vmem:[#allocation4 + $0x78] sm:$0xff]
    %s44 = smul.u32 0, 128
    %v45 = vlaneseq
    %v46 = vshrl.u32 %v45, 7
    %v47 = vadd.s32 %v46, 8
    %v48 = vlaneseq
    %v49 = vand.u32 %v48, 127
    %v50 = vstv %s44
    %v51 = vadd.s32 %v49, %v50
    %s52 = sld [smem:[#allocation3]]
    %s53 = sld [smem:[#allocation3 + $0x1]]
    %s54 = sld [smem:[#allocation3 + $0x2]]
    %s55 = sld [smem:[#allocation3 + $0x3]]
    %s56 = sld [smem:[#allocation3 + $0x4]]
    %s57 = sld [smem:[#allocation3 + $0x5]]
    %s58 = sld [smem:[#allocation3 + $0x6]]
    %s59 = sld [smem:[#allocation3 + $0x7]]
    %v60 = vstv %s52
    %vm61 = vcmp.ge.s32.totalorder %v46, %v60
    %vm62 = vcmp.ge.s32.totalorder %v47, %v60
    %v63 = vstv %s53
    %vm64 = vcmp.lt.s32.totalorder %v46, %v63
    %vm65 = vcmp.lt.s32.totalorder %v47, %v63
    %vm66 = vmand %vm61, %vm64
    %vm67 = vmand %vm62, %vm65
    %v68 = vstv %s54
    %vm69 = vcmp.ge.s32.totalorder %v46, %v68
    %vm70 = vcmp.ge.s32.totalorder %v47, %v68
    %v71 = vstv %s55
    %vm72 = vcmp.lt.s32.totalorder %v46, %v71
    %vm73 = vcmp.lt.s32.totalorder %v47, %v71
    %vm74 = vmand %vm69, %vm72
    %vm75 = vmand %vm70, %vm73
    %vm76 = vmor %vm66, %vm74
    %vm77 = vmor %vm67, %vm75
    %v78 = vstv %s56
    %vm79 = vcmp.ge.s32.totalorder %v51, %v78
    %v80 = vstv %s57
    %vm81 = vcmp.lt.s32.totalorder %v51, %v80
    %vm82 = vmand %vm79, %vm81
    %v83 = vstv %s58
    %vm84 = vcmp.ge.s32.totalorder %v51, %v83
    %v85 = vstv %s59
    %vm86 = vcmp.lt.s32.totalorder %v51, %v85
    %vm87 = vmand %vm84, %vm86
    %vm88 = vmor %vm82, %vm87
    %v89 = vsel %vm76, 1, 0
    %v90 = vsel %vm77, 1, 0
    %vm91 = vcmp.eq.s32.totalorder %v89, 1
    %vm92 = vcmp.eq.s32.totalorder %v90, 1
    %v93 = vsel %vm88, 1, 0
    %vm94 = vcmp.eq.s32.totalorder %v93, 1
    %vm95 = vmor %vm91, %vm94
    %vm96 = vmor %vm92, %vm94
    %vm97 = vmxor %vm95, 1
    %vm98 = vmxor %vm96, 1
    %v99 = vsel %vm97, 1, 0
    %v100 = vsel %vm98, 1, 0
    %vm101 = vcmp.eq.s32.totalorder %v99, 1
    %vm102 = vcmp.eq.s32.totalorder %v100, 1
    %v103 = vsel %vm101, %v28, 0.0
    %v104 = vsel %vm102, %v29, 0.0
    %v105 = vsel %vm101, %v30, 0.0
    %v106 = vsel %vm102, %v31, 0.0
    %v107 = vsel %vm101, %v32, 0.0
    %v108 = vsel %vm102, %v33, 0.0
    %v109 = vsel %vm101, %v34, 0.0
    %v110 = vsel %vm102, %v35, 0.0
    %v111 = vsel %vm101, %v36, 0.0
    %v112 = vsel %vm102, %v37, 0.0
    %v113 = vsel %vm101, %v38, 0.0
    %v114 = vsel %vm102, %v39, 0.0
    %v115 = vsel %vm101, %v40, 0.0
    %v116 = vsel %vm102, %v41, 0.0
    %v117 = vsel %vm101, %v42, 0.0
    %v118 = vsel %vm102, %v43, 0.0
    %119 = vst [vmem:[#allocation7] sm:$0xff] %v103
    %120 = vst [vmem:[#allocation7 + $0x8] sm:$0xff] %v104
    %121 = vst [vmem:[#allocation7 + $0x10] sm:$0xff] %v105
    %122 = vst [vmem:[#allocation7 + $0x18] sm:$0xff] %v106
    %123 = vst [vmem:[#allocation7 + $0x20] sm:$0xff] %v107
    %124 = vst [vmem:[#allocation7 + $0x28] sm:$0xff] %v108
    %125 = vst [vmem:[#allocation7 + $0x30] sm:$0xff] %v109
    %126 = vst [vmem:[#allocation7 + $0x38] sm:$0xff] %v110
    %127 = vst [vmem:[#allocation7 + $0x40] sm:$0xff] %v111
    %128 = vst [vmem:[#allocation7 + $0x48] sm:$0xff] %v112
    %129 = vst [vmem:[#allocation7 + $0x50] sm:$0xff] %v113
    %130 = vst [vmem:[#allocation7 + $0x58] sm:$0xff] %v114
    %131 = vst [vmem:[#allocation7 + $0x60] sm:$0xff] %v115
    %132 = vst [vmem:[#allocation7 + $0x68] sm:$0xff] %v116
    %133 = vst [vmem:[#allocation7 + $0x70] sm:$0xff] %v117
    %134 = vst [vmem:[#allocation7 + $0x78] sm:$0xff] %v118
    // Predicated region
    $region10: #{tpu_custom_call.1} parent=1 // pred_check
      _
    $region11: #{tpu_custom_call.1} parent=1 // pred_check_branch
      %136 = sbr.rel (0) target = $region13
    $region12: #{tpu_custom_call.1} parent=1 // pred_region
      %s138 = ssub.s32 2048, 2048
      %139 = vsyncadd [#allocation6], %s138
      %s140 = sshll.u32 [#allocation7], 4
      %s141 = int_to_ptr.vmem [resolvable:$true] %s140
      %146 = dma.vmem_to_hbm [thread:$0]  %s141, 2048, %s2, [#allocation6], 128, 128, 8
    $region13: #{tpu_custom_call.1} parent=1 // pred_fallthru
      _
    // Predicated region
    $region14: #{tpu_custom_call.1} parent=1 // pred_check
      _
    $region15: #{tpu_custom_call.1} parent=1 // pred_check_branch
      %148 = sbr.rel (0) target = $region17
    $region16: #{tpu_custom_call.1} parent=1 // pred_region
      %149 = dma.done [#allocation6], 2048
    $region17: #{tpu_custom_call.1} parent=1 // pred_fallthru
      _
    %150 = vsyncpa [#allocation5], 1
    %151 = vsyncpa [#allocation6], 1

</llo_original>
